<compile_context>
chip_gen: v7x
topology: tpu7x:2x2x1
jax: 0.10.0
libtpu: 0.0.40
codegen_flags: <defaults>
</compile_context>

<pallas_src>
import functools

import jax
import jax.numpy as jnp
from jax.experimental import pallas as pl
from jax.experimental.pallas import tpu as pltpu


def _round_up(x: int, m: int) -> int:
    return ((x + m - 1) // m) * m


def _layernorm_kernel(x_ref, alpha_ref, bias_ref, o_ref, *, eps: float, features: int):
    x = x_ref[...].astype(jnp.float32)                     # (tile_rows, features), f32 compute
    inv_f = 1.0 / features

    mean = jnp.sum(x, axis=-1, keepdims=True) * inv_f
    diff = x - mean
    var = jnp.sum(diff * diff, axis=-1, keepdims=True) * inv_f   # biased variance
    std = jnp.sqrt(var)
    # Exact reciprocal: this is a (tile_rows, 1) column, so it is not a perf lever;
    # exactness keeps the 1e-5 tolerance vs. the reference.
    inv_std = pl.reciprocal(std + eps, approx=False)

    out = (alpha_ref[...].astype(jnp.float32) * (diff * inv_std)
           + bias_ref[...].astype(jnp.float32))
    o_ref[...] = out.astype(o_ref.dtype)


def _vmem_capacity_bytes() -> int:
    try:
        info = pltpu.get_tpu_info()
        return int(getattr(info, "vmem_capacity_bytes", 64 * 2**20))
    except Exception:
        return 64 * 2**20                                  # conservative (v7x per-TC VMEM)


def _choose_tile_rows(rows: int, features: int, itemsize: int, vmem_bytes: int) -> int:
    """Row-tile size: large DMA blocks, f32 working set accounted, >= ~4 grid steps."""
    # Smaller budget fraction on small-VMEM chips (v7x: 64 MiB per TC).
    frac = 0.25 if vmem_bytes <= 64 * 2**20 else 0.40
    budget = int(vmem_bytes * frac)

    # Per-row bytes: double-buffered in + out I/O tiles, plus ~3 f32 row-copies of
    # compute temporaries (x.astype(f32), diff, the scaled output expression).
    per_row = 2 * features * (2 * itemsize) + 3 * features * 4
    by_vmem = max(budget // max(per_row, 1), 8)

    # Aim for ~4 MiB input DMA blocks (HBM efficiency plateaus around MiB-class blocks).
    by_block = max((4 * 2**20) // max(features * itemsize, 1), 8)

    tile = min(by_vmem, by_block)

    # Keep >= ~4 grid steps when possible: shards across v7x's two TensorCores via the
    # "parallel" axis and gives the DMA pipeline something to overlap.
    by_steps = _round_up(pl.cdiv(rows, 4), 8)
    tile = min(tile, by_steps)

    tile = max((tile // 8) * 8, 8)
    if rows <= tile:
        # Single-block case: a full-extent row block is always legal (even rows < 8).
        tile = rows if rows < 8 else _round_up(min(tile, _round_up(rows, 8)), 8)
    return tile


def layer_normalization(x, alpha, bias, eps: float = 1e-6, *, tile_rows: int | None = None):
    """Normalizes x over its last axis. x: (..., features); alpha, bias: (features,)."""
    orig_shape = x.shape
    features = orig_shape[-1]
    out_dtype = x.dtype

    x2 = x.reshape(-1, features)
    rows = x2.shape[0]
    itemsize = jnp.dtype(x.dtype).itemsize

    vmem_bytes = _vmem_capacity_bytes()
    if tile_rows is None:
        tile_rows = _choose_tile_rows(rows, features, itemsize, vmem_bytes)
    tile_rows = int(tile_rows)

    grid_rows = pl.cdiv(rows, tile_rows)
    vmem_limit = int(min(vmem_bytes * 3 // 4, 96 * 2**20))

    alpha2 = alpha.reshape(1, features)
    bias2 = bias.reshape(1, features)

    kernel = functools.partial(_layernorm_kernel, eps=float(eps), features=features)
    out = pl.pallas_call(
        kernel,
        out_shape=jax.ShapeDtypeStruct((rows, features), out_dtype),
        grid_spec=pltpu.PrefetchScalarGridSpec(
            num_scalar_prefetch=0,
            grid=(grid_rows,),
            in_specs=[
                # Full-extent feature dim: no lane padding needed; Pallas masks the
                # ragged last row-block itself.
                pl.BlockSpec((tile_rows, features), lambda i: (i, 0)),
                pl.BlockSpec((1, features), lambda i: (0, 0)),   # alpha: VMEM-resident
                pl.BlockSpec((1, features), lambda i: (0, 0)),   # bias:  VMEM-resident
            ],
            out_specs=pl.BlockSpec((tile_rows, features), lambda i: (i, 0)),
        ),
        compiler_params=pltpu.CompilerParams(
            dimension_semantics=("parallel",),
            vmem_limit_bytes=vmem_limit,
        ),
    )(x2, alpha2, bias2)

    return out.reshape(orig_shape)


def _reference(x, alpha, bias, eps: float = 1e-6):
    xf = x.astype(jnp.float32)
    mean = jnp.mean(xf, axis=-1, keepdims=True)
    diff = xf - mean
    std = jnp.sqrt(jnp.mean(diff * diff, axis=-1, keepdims=True))
    return (alpha * (diff / (std + eps)) + bias).astype(x.dtype)


if __name__ == "__main__":
    root = jax.random.PRNGKey(0)
    k0, k1, k2, k3 = jax.random.split(root, 4)

    # Shape consistent with the module usage: seq=8, hidden=32, default parameters.
    rows, features = 8, 32
    x = jax.random.normal(k0, (rows, features), dtype=jnp.float32)
    alpha = jnp.ones((features,), dtype=jnp.float32)    # nn.Parameter(torch.ones(features))
    bias = jnp.zeros((features,), dtype=jnp.float32)    # nn.Parameter(torch.zeros(features))

    out = jax.block_until_ready(layer_normalization(x, alpha, bias))
    ref = _reference(x, alpha, bias)
    assert out.shape == (rows, features)
    assert jnp.allclose(out, ref, atol=1e-5, rtol=1e-5), "mismatch vs reference (base shape)"

    # The exact example from the spec: 3x3 tensor, features=3 (full-extent ragged block).
    x_spec = jnp.array([[1.0, 2.0, 3.0], [4.0, 5.0, 6.0], [7.0, 8.0, 9.0]], dtype=jnp.float32)
    a_spec = jnp.ones((3,), dtype=jnp.float32)
    b_spec = jnp.zeros((3,), dtype=jnp.float32)
    out_spec = jax.block_until_ready(layer_normalization(x_spec, a_spec, b_spec))
    ref_spec = _reference(x_spec, a_spec, b_spec)
    assert jnp.allclose(out_spec, ref_spec, atol=1e-5, rtol=1e-5), "mismatch vs reference (3x3)"

    # Ragged shape: rows not a multiple of 8, features not a multiple of 128
    # (exercises the boundary-masked last row-block and full-extent feature block).
    rows2, features2 = 7, 96
    x2 = jax.random.normal(k1, (rows2, features2), dtype=jnp.float32)
    alpha2 = jax.random.normal(k2, (features2,), dtype=jnp.float32)
    bias2 = jax.random.normal(k3, (features2,), dtype=jnp.float32)

    out2 = jax.block_until_ready(layer_normalization(x2, alpha2, bias2))
    ref2 = _reference(x2, alpha2, bias2)
    assert out2.shape == (rows2, features2)
    assert jnp.allclose(out2, ref2, atol=1e-5, rtol=1e-5), "mismatch vs reference (ragged shape)"

    print("KERNEL_OK")
</pallas_src>

<mosaic_0001>
module attributes {stable_mosaic.version = 11 : i64} {
  func.func @_layernorm_kernel(%arg0: i32, %arg1: memref<8x32xf32, #tpu.memory_space<vmem>>, %arg2: memref<1x32xf32, #tpu.memory_space<vmem>>, %arg3: memref<1x32xf32, #tpu.memory_space<vmem>>, %arg4: memref<8x32xf32, #tpu.memory_space<vmem>>) attributes {dimension_semantics = [#tpu.dimension_semantics<parallel>], iteration_bounds = array<i64: 1>, scalar_prefetch = 0 : i64, scratch_operands = 0 : i64, tpu.core_type = #tpu.core_type<tc>, window_params = [{transform_indices = @transform_0, window_bounds = array<i64: 8, 32>}, {pipeline_mode = #tpu.pipeline_mode<synchronous>, transform_indices = @transform_1, window_bounds = array<i64: 1, 32>}, {pipeline_mode = #tpu.pipeline_mode<synchronous>, transform_indices = @transform_2, window_bounds = array<i64: 1, 32>}, {transform_indices = @transform_3, window_bounds = array<i64: 8, 32>}]} {
    %c0 = arith.constant 0 : index
    %c0_0 = arith.constant 0 : index
    %0 = vector.load %arg1[%c0, %c0_0] : memref<8x32xf32, #tpu.memory_space<vmem>>, vector<8x32xf32>
    %cst = arith.constant dense<0.000000e+00> : vector<8xf32>
    %1 = vector.multi_reduction <add>, %0, %cst [1] : vector<8x32xf32> to vector<8xf32>
    %2 = vector.shape_cast %1 : vector<8xf32> to vector<8x1xf32>
    %cst_1 = arith.constant 3.125000e-02 : f32
    %3 = vector.broadcast %cst_1 : f32 to vector<8x1xf32>
    %4 = arith.mulf %2, %3 : vector<8x1xf32>
    %5 = vector.broadcast %4 : vector<8x1xf32> to vector<8x32xf32>
    %6 = arith.subf %0, %5 : vector<8x32xf32>
    %7 = arith.mulf %6, %6 : vector<8x32xf32>
    %cst_2 = arith.constant dense<0.000000e+00> : vector<8xf32>
    %8 = vector.multi_reduction <add>, %7, %cst_2 [1] : vector<8x32xf32> to vector<8xf32>
    %9 = vector.shape_cast %8 : vector<8xf32> to vector<8x1xf32>
    %cst_3 = arith.constant 3.125000e-02 : f32
    %10 = vector.broadcast %cst_3 : f32 to vector<8x1xf32>
    %11 = arith.mulf %9, %10 : vector<8x1xf32>
    %12 = math.sqrt %11 : vector<8x1xf32>
    %cst_4 = arith.constant 9.99999997E-7 : f32
    %13 = vector.broadcast %cst_4 : f32 to vector<8x1xf32>
    %14 = arith.addf %12, %13 : vector<8x1xf32>
    %15 = tpu.reciprocal %14 : vector<8x1xf32> -> vector<8x1xf32>
    %c0_5 = arith.constant 0 : index
    %c0_6 = arith.constant 0 : index
    %16 = vector.load %arg2[%c0_5, %c0_6] : memref<1x32xf32, #tpu.memory_space<vmem>>, vector<1x32xf32>
    %17 = vector.broadcast %15 : vector<8x1xf32> to vector<8x32xf32>
    %18 = arith.mulf %6, %17 : vector<8x32xf32>
    %19 = vector.broadcast %16 : vector<1x32xf32> to vector<8x32xf32>
    %20 = arith.mulf %19, %18 : vector<8x32xf32>
    %c0_7 = arith.constant 0 : index
    %c0_8 = arith.constant 0 : index
    %21 = vector.load %arg3[%c0_7, %c0_8] : memref<1x32xf32, #tpu.memory_space<vmem>>, vector<1x32xf32>
    %22 = vector.broadcast %21 : vector<1x32xf32> to vector<8x32xf32>
    %23 = arith.addf %20, %22 : vector<8x32xf32>
    %c0_9 = arith.constant 0 : index
    %c0_10 = arith.constant 0 : index
    %24 = vector.load %arg4[%c0_9, %c0_10] : memref<8x32xf32, #tpu.memory_space<vmem>>, vector<8x32xf32>
    tpu.vector_store %arg4[%c0_9, %c0_10], %23 {strides = array<i32>} : memref<8x32xf32, #tpu.memory_space<vmem>>, vector<8x32xf32>,
    return
  }
  func.func @transform_0(%arg0: i32) -> (i32, i32) {
    %c0_i32 = arith.constant 0 : i32
    %c0_i32_0 = arith.constant 0 : i32
    return %arg0, %c0_i32 : i32, i32
  }
  func.func @transform_1(%arg0: i32) -> (i32, i32) {
    %c0_i32 = arith.constant 0 : i32
    %c0_i32_0 = arith.constant 0 : i32
    %c0_i32_1 = arith.constant 0 : i32
    return %c0_i32, %c0_i32_0 : i32, i32
  }
  func.func @transform_2(%arg0: i32) -> (i32, i32) {
    %c0_i32 = arith.constant 0 : i32
    %c0_i32_0 = arith.constant 0 : i32
    %c0_i32_1 = arith.constant 0 : i32
    return %c0_i32, %c0_i32_0 : i32, i32
  }
  func.func @transform_3(%arg0: i32) -> (i32, i32) {
    %c0_i32 = arith.constant 0 : i32
    %c0_i32_0 = arith.constant 0 : i32
    return %arg0, %c0_i32 : i32, i32
  }
}

</mosaic_0001>

<llo_original>
// kernel: tpu_custom_call.1
$region0: #{tpu_custom_call.1}
  #allocation0 [shape = 'u32[]', space=smem, size = 0x4, offset = 0x4, fixed_abs, tag = 'smem constant byte address 0x4 - core index']
  #allocation1 [shape = 'u32[144,128]{1,0:T(1,128)}', space=vmem, size = 0x12000, scoped, tag = 'internal scratch']
  %s0 = inlined_call_operand.hbm [shape: f32[8,32], index: 0, kind: input, shape index: {}]
  %s1 = inlined_call_operand.vmem [shape: f32[1,32], index: 1, kind: input, shape index: {}]
  %s2 = inlined_call_operand.vmem [shape: f32[1,32], index: 2, kind: input, shape index: {}]
  %s3 = inlined_call_operand.hbm [shape: f32[8,32], index: 3, kind: output, shape index: {}]
  %s4 = sld [smem:[#allocation0]]
  $region26: #{tpu_custom_call.1} parent=0
    _
  %s6 = ssub.s32 1, %s4
  %s7 = scalar_select 0, %s6, %s4
  $region1: #{tpu_custom_call.1} parent=0
    #allocation2 [shape = 'u8[4096]{0}', space=vmem, size = 0x1000, scoped, tag = 'input window, operand 0, single buffered']
    #allocation3 [shape = 's32[1]{0}', space=sflag, size = 0x4, scoped, tag = 'scoped memory for tpu_custom_call.1']
    #allocation4 [shape = 's32[1]{0}', space=sflag, size = 0x4, scoped, tag = 'scoped memory for tpu_custom_call.1']
    #allocation5 [shape = 'u8[4096]{0}', space=vmem, size = 0x1000, scoped, tag = 'output window, operand 0, single buffered']
    %8 = vsyncpa [#allocation3], 0
    %9 = vsyncpa [#allocation4], 0
    // Predicated region
    $region2: #{tpu_custom_call.1} parent=1 // pred_check
      _
    $region3: #{tpu_custom_call.1} parent=1 // pred_check_branch
      %11 = sbr.rel (0) target = $region5
    $region4: #{tpu_custom_call.1} parent=1 // pred_region
      %s13 = ssub.s32 128, 128
      %14 = vsyncadd [#allocation3], %s13
      %s16 = sshll.u32 [#allocation2], 4
      %s17 = int_to_ptr.vmem [resolvable:$true] %s16
      %19 = dma.hbm_to_vmem [thread:$0]  %s0, 128, %s17, [#allocation3]
    $region5: #{tpu_custom_call.1} parent=1 // pred_fallthru
      _
    // Predicated region
    $region6: #{tpu_custom_call.1} parent=1 // pred_check
      _
    $region7: #{tpu_custom_call.1} parent=1 // pred_check_branch
      %21 = sbr.rel (0) target = $region9
    $region8: #{tpu_custom_call.1} parent=1 // pred_region
      _
    $region9: #{tpu_custom_call.1} parent=1 // pred_fallthru
      _
    // Predicated region
    $region10: #{tpu_custom_call.1} parent=1 // pred_check
      _
    $region11: #{tpu_custom_call.1} parent=1 // pred_check_branch
      %23 = sbr.rel (0) target = $region13
    $region12: #{tpu_custom_call.1} parent=1 // pred_region
      _
    $region13: #{tpu_custom_call.1} parent=1 // pred_fallthru
      _
    // Predicated region
    $region14: #{tpu_custom_call.1} parent=1 // pred_check
      _
    $region15: #{tpu_custom_call.1} parent=1 // pred_check_branch
      %25 = sbr.rel (0) target = $region17
    $region16: #{tpu_custom_call.1} parent=1 // pred_region
      %26 = dma.done [#allocation3], 128
    $region17: #{tpu_custom_call.1} parent=1 // pred_fallthru
      _
    %v27 = vld [vmem:[#allocation2] sm:$0xff]
    %vm28 = vcmask 261120
    %v29 = vsel %vm28, %v27, 0.0
    %30 = vadd.xlane.f32.xlu0 %v29
    %v31 = vpop.xlane.xlu0 %30
    %v32 = vmul.f32 %v31, 0.03125
    %v33 = vsub.f32 %v27, %v32
    %v34 = vmul.f32 %v33, %v33
    %v35 = vsel %vm28, %v34, 0.0
    %36 = vadd.xlane.f32.xlu0 %v35
    %v37 = vpop.xlane.xlu0 %36
    %v38 = vmul.f32 %v37, 0.03125
    %v39 = vrsqrt.pop %v38
    %v40 = vmul.f32 %v38, %v39
    %vm41 = vcmp.eq.f32.partialorder %v38, inf
    %v42 = vsel %vm41, %v38, %v40
    %vm43 = vcmp.eq.f32.partialorder %v38, 0.0
    %v44 = vand.u32 %v38, 2147483648
    %v45 = vsel %vm43, %v44, %v42
    %v46 = vadd.f32 %v45, 1e-06
    %v47 = vrcp.pop %v46
    %v48 = vld [vmem:[%s1] sm:$0x1]
    %v49 = vmul.f32 %v33, %v47
    %v51 = vlaneseq
    %v52 = vshrl.u32 %v51, 7
    %v53 = vsub.s32 0, %v52
    %v54 = vrot.slane %v48, %v53
    %v56 = vmul.f32 %v54, %v49
    %v57 = vld [vmem:[%s2] sm:$0x1]
    %v59 = vlaneseq
    %v60 = vshrl.u32 %v59, 7
    %v61 = vsub.s32 0, %v60
    %v62 = vrot.slane %v57, %v61
    %v64 = vadd.f32 %v56, %v62
    %65 = vst.msk [vmem:[#allocation5] sm:$0xff] %vm28, %v64
    // Predicated region
    $region18: #{tpu_custom_call.1} parent=1 // pred_check
      _
    $region19: #{tpu_custom_call.1} parent=1 // pred_check_branch
      %67 = sbr.rel (0) target = $region21
    $region20: #{tpu_custom_call.1} parent=1 // pred_region
      %s69 = ssub.s32 128, 128
      %70 = vsyncadd [#allocation4], %s69
      %s72 = sshll.u32 [#allocation5], 4
      %s73 = int_to_ptr.vmem [resolvable:$true] %s72
      %75 = dma.vmem_to_hbm [thread:$0]  %s73, 128, %s3, [#allocation4]
    $region21: #{tpu_custom_call.1} parent=1 // pred_fallthru
      _
    // Predicated region
    $region22: #{tpu_custom_call.1} parent=1 // pred_check
      _
    $region23: #{tpu_custom_call.1} parent=1 // pred_check_branch
      %77 = sbr.rel (0) target = $region25
    $region24: #{tpu_custom_call.1} parent=1 // pred_region
      %78 = dma.done [#allocation4], 128
    $region25: #{tpu_custom_call.1} parent=1 // pred_fallthru
      _
    %79 = vsyncpa [#allocation3], 1
    %80 = vsyncpa [#allocation4], 1

</llo_original>
